<compile_context>
chip_gen: v6e
topology: v6e:2x2x1
jax: 0.10.0
libtpu: 0.0.40
codegen_flags: <defaults>
</compile_context>

<pallas_src>
import functools
import numpy as np
import jax
import jax.numpy as jnp
from jax.experimental import pallas as pl
from jax.experimental.pallas import tpu as pltpu


def _tree_kernel(xT_ref, gtb_ref, leafT_ref, out_ref, *, depth, L, lpg, approx):
    # xT_ref    : (F+1, T)        original features + constant-1 row, batch on lanes
    # gtb_ref   : (depth*L, F+1)  fused signed one-hot gather + bias column
    # leafT_ref : (C, L)          leaf values, transposed
    # out_ref   : (C, T)          output, batch on lanes
    x = xT_ref[...]                                            # (F+1, T)
    gtb = gtb_ref[...]                                         # tiny; load once
    path = None
    for g0 in range(0, depth, lpg):                            # static level groups
        g1 = min(g0 + lpg, depth)
        # one MXU push per group: u[l*L+j, t] = sign * (theta - x[feature])
        u = jnp.dot(gtb[g0 * L:g1 * L, :], x,
                    preferred_element_type=jnp.float32)        # ((g1-g0)*L, T)
        # sigmoid via exp + (approximate) reciprocal: both live on the EUP slot
        d = pl.reciprocal(1.0 + jnp.exp(-u), approx=approx)
        for l in range(g1 - g0):                               # static sublane slices
            dl = d[l * L:(l + 1) * L, :]                       # (L, T)
            path = dl if path is None else path * dl           # VPU multiply chain
    out_ref[...] = jnp.dot(leafT_ref[...], path,
                           preferred_element_type=jnp.float32).astype(out_ref.dtype)


def decision_tree_forward(x, theta, leaf_values, ranked, depth, *,
                          tile_b=4096, mxu_m=256, approx_sigmoid=True):
    """Pallas equivalent of DifferentiableDecisionTree(depth, C, ranked)(x)."""
    B, F = x.shape
    L = 2 ** depth
    C = leaf_values.shape[1]
    ranked = np.asarray(ranked)

    # --- static per-(level, leaf) tables ------------------------------------
    j = np.arange(L)
    node_idx = np.zeros((depth, L), dtype=np.int64)
    sign = np.zeros((depth, L), dtype=np.float32)
    for l in range(depth):
        i_l = j >> (depth - l)               # ancestor index within level l
        bit = (j >> (depth - 1 - l)) & 1     # 0 = left child, 1 = right child
        node_idx[l] = (2 ** l - 1) + i_l
        sign[l] = np.where(bit == 0, 1.0, -1.0)

    # fused gather+bias matrix GT': u = GT' @ [x; 1] = sign*(theta - x[ranked[node%F]])
    col = ranked[node_idx % F]                                  # (depth, L), original feat idx
    neg_onehot = np.zeros((depth * L, F), dtype=np.float32)
    rows = (np.arange(depth)[:, None] * L + j[None, :]).reshape(-1)
    neg_onehot[rows, col.reshape(-1)] = -sign.reshape(-1)
    bias_col = (jnp.asarray(sign) * theta[node_idx].astype(jnp.float32)
                ).reshape(depth * L, 1)                         # runtime (theta)
    gtb = jnp.concatenate([jnp.asarray(neg_onehot), bias_col], axis=1)  # (depth*L, F+1)

    # lane-dense operands (batch on lanes).  NOTE: these wrapper-side transposes are
    # an extra HBM pass at large B — prefer feeding (F, B) / consuming (C, B) upstream.
    xT = jnp.concatenate(
        [jnp.transpose(x.astype(jnp.float32)), jnp.ones((1, B), jnp.float32)], axis=0)
    leafT = jnp.transpose(leaf_values.astype(jnp.float32))      # (C, L)

    # --- level grouping so fused matmul M ~ MXU M tile (128 v5e / 256 v6e,v7x) ---
    lpg = max(1, min(depth, mxu_m // L)) if L <= mxu_m else 1

    # --- batch tile: multiple of 128, big enough to amortize ~0.35us/step, ---
    # --- VMEM-budgeted (safe on v7x), and >=2 grid steps when batch allows. ---
    tile_b = max(128, (int(tile_b) // 128) * 128)
    per_col_bytes = 4 * (lpg * L + L + 2 * (F + 1) + 2 * C)  # sigmoid + path + dbuf I/O
    vmem_budget = 24 * 1024 * 1024
    tile_b = min(tile_b, max(128, (vmem_budget // per_col_bytes) // 128 * 128))
    b_ceil = pl.cdiv(B, 128) * 128            # smallest legal padded batch
    tile_b = min(tile_b, b_ceil)
    if b_ceil >= 256 and tile_b > b_ceil // 2:
        tile_b = max(128, (b_ceil // 2) // 128 * 128)   # >=2 steps for v7x's 2 TCs
    B_pad = pl.cdiv(B, tile_b) * tile_b
    if B_pad != B:
        xT = jnp.pad(xT, ((0, 0), (0, B_pad - B)))

    kernel = functools.partial(_tree_kernel, depth=depth, L=L, lpg=lpg,
                               approx=approx_sigmoid)
    outT = pl.pallas_call(
        kernel,
        out_shape=jax.ShapeDtypeStruct((C, B_pad), jnp.float32),
        grid=(B_pad // tile_b,),
        in_specs=[
            pl.BlockSpec((F + 1, tile_b), lambda i: (0, i)),
            pl.BlockSpec((depth * L, F + 1), lambda i: (0, 0)),  # constant -> DMA elided
            pl.BlockSpec((C, L), lambda i: (0, 0)),              # constant -> DMA elided
        ],
        out_specs=pl.BlockSpec((C, tile_b), lambda i: (0, i)),
        compiler_params=pltpu.CompilerParams(dimension_semantics=("parallel",)),
    )(xT, gtb, leafT)

    return jnp.transpose(outT)[:B].astype(x.dtype)              # (B, C)


def reference_forward(x, theta, leaf_values, ranked, depth):
    """Pure-JAX transcription of the PyTorch forward (for verification)."""
    B, F = x.shape
    L = 2 ** depth
    path = jnp.ones((B, L), x.dtype)
    xp = x[:, np.asarray(ranked)]
    for level in range(depth):
        level_start = 2 ** level - 1
        parent = path
        indices = np.arange(2 ** level)
        node_indices = level_start + indices
        decisions = jnp.stack(
            [jax.nn.sigmoid(theta[idx] - xp[:, idx % F]) for idx in node_indices],
            axis=1,
        )
        left = indices * 2
        right = left + 1
        path = path.at[:, left].set(parent[:, indices] * decisions)
        path = path.at[:, right].set(parent[:, indices] * (1.0 - decisions))
    return path @ leaf_values


if __name__ == "__main__":
    depth = 3
    num_classes = 4
    num_features = 5
    batch = 16

    key = jax.random.PRNGKey(0)
    k_theta, k_leaf, k_x, k_perm = jax.random.split(key, 4)

    # deterministic "randn" parameters (module __init__ shapes)
    theta = jax.random.normal(k_theta, (2 ** depth - 1,), jnp.float32)
    leaf_values = jax.random.normal(k_leaf, (2 ** depth, num_classes), jnp.float32)
    ranked_features_indice = np.asarray(jax.random.permutation(k_perm, num_features))

    x = jax.random.normal(k_x, (batch, num_features), jnp.float32)

    ref = reference_forward(x, theta, leaf_values, ranked_features_indice, depth)

    # Exact-sigmoid path: validates the fused gather/bias math bit-for-bit-ish.
    out_exact = jax.block_until_ready(decision_tree_forward(
        x, theta, leaf_values, ranked_features_indice, depth, approx_sigmoid=False))
    np.testing.assert_allclose(np.asarray(out_exact), np.asarray(ref),
                               rtol=1e-5, atol=1e-5)

    # Default fast path: approximate EUP reciprocal in the sigmoid.
    out_fast = jax.block_until_ready(decision_tree_forward(
        x, theta, leaf_values, ranked_features_indice, depth))
    np.testing.assert_allclose(np.asarray(out_fast), np.asarray(ref),
                               rtol=2e-2, atol=2e-2)

    print("KERNEL_OK")
</pallas_src>

<mosaic_0001>
module attributes {stable_mosaic.version = 11 : i64} {
  func.func @_tree_kernel(%arg0: i32, %arg1: memref<6x128xf32, #tpu.memory_space<vmem>>, %arg2: memref<24x6xf32, #tpu.memory_space<vmem>>, %arg3: memref<4x8xf32, #tpu.memory_space<vmem>>, %arg4: memref<4x128xf32, #tpu.memory_space<vmem>>) attributes {dimension_semantics = [#tpu.dimension_semantics<parallel>], iteration_bounds = array<i64: 1>, scalar_prefetch = 0 : i64, scratch_operands = 0 : i64, tpu.core_type = #tpu.core_type<tc>, window_params = [{transform_indices = @transform_0, window_bounds = array<i64: 6, 128>}, {pipeline_mode = #tpu.pipeline_mode<synchronous>, transform_indices = @transform_1, window_bounds = array<i64: 24, 6>}, {pipeline_mode = #tpu.pipeline_mode<synchronous>, transform_indices = @transform_2, window_bounds = array<i64: 4, 8>}, {transform_indices = @transform_3, window_bounds = array<i64: 4, 128>}]} {
    %c0 = arith.constant 0 : index
    %c0_0 = arith.constant 0 : index
    %0 = vector.load %arg1[%c0, %c0_0] : memref<6x128xf32, #tpu.memory_space<vmem>>, vector<6x128xf32>
    %c0_1 = arith.constant 0 : index
    %c0_2 = arith.constant 0 : index
    %1 = vector.load %arg2[%c0_1, %c0_2] : memref<24x6xf32, #tpu.memory_space<vmem>>, vector<24x6xf32>
    %cst = arith.constant dense<0.000000e+00> : vector<24x128xf32>
    %2 = tpu.matmul %1, %0, %cst {dimension_numbers = #tpu.dot_dimension_numbers<[1], [0], [0], [1], [0, 0, 1, 1], [], []>} : vector<24x6xf32>, vector<6x128xf32>, vector<24x128xf32> -> vector<24x128xf32>
    %cst_3 = arith.constant 0.000000e+00 : f32
    %3 = vector.broadcast %cst_3 : f32 to vector<24x128xf32>
    %4 = arith.subf %3, %2 : vector<24x128xf32>
    %5 = math.exp %4 : vector<24x128xf32>
    %cst_4 = arith.constant 1.000000e+00 : f32
    %6 = vector.broadcast %cst_4 : f32 to vector<24x128xf32>
    %7 = arith.addf %6, %5 : vector<24x128xf32>
    %8 = tpu.reciprocal %7 : vector<24x128xf32> -> vector<24x128xf32>
    %9 = vector.extract_strided_slice %8 {offsets = [0, 0], sizes = [8, 128], strides = [1, 1]} : vector<24x128xf32> to vector<8x128xf32>
    %10 = vector.extract_strided_slice %8 {offsets = [8, 0], sizes = [8, 128], strides = [1, 1]} : vector<24x128xf32> to vector<8x128xf32>
    %11 = arith.mulf %9, %10 : vector<8x128xf32>
    %12 = vector.extract_strided_slice %8 {offsets = [16, 0], sizes = [8, 128], strides = [1, 1]} : vector<24x128xf32> to vector<8x128xf32>
    %13 = arith.mulf %11, %12 : vector<8x128xf32>
    %c0_5 = arith.constant 0 : index
    %c0_6 = arith.constant 0 : index
    %14 = vector.load %arg3[%c0_5, %c0_6] : memref<4x8xf32, #tpu.memory_space<vmem>>, vector<4x8xf32>
    %cst_7 = arith.constant dense<0.000000e+00> : vector<4x128xf32>
    %15 = tpu.matmul %14, %13, %cst_7 {dimension_numbers = #tpu.dot_dimension_numbers<[1], [0], [0], [1], [0, 0, 1, 1], [], []>} : vector<4x8xf32>, vector<8x128xf32>, vector<4x128xf32> -> vector<4x128xf32>
    %c0_8 = arith.constant 0 : index
    %c0_9 = arith.constant 0 : index
    %16 = vector.load %arg4[%c0_8, %c0_9] : memref<4x128xf32, #tpu.memory_space<vmem>>, vector<4x128xf32>
    tpu.vector_store %arg4[%c0_8, %c0_9], %15 {strides = array<i32>} : memref<4x128xf32, #tpu.memory_space<vmem>>, vector<4x128xf32>,
    return
  }
  func.func @transform_0(%arg0: i32) -> (i32, i32) {
    %c0_i32 = arith.constant 0 : i32
    %c0_i32_0 = arith.constant 0 : i32
    return %c0_i32, %arg0 : i32, i32
  }
  func.func @transform_1(%arg0: i32) -> (i32, i32) {
    %c0_i32 = arith.constant 0 : i32
    %c0_i32_0 = arith.constant 0 : i32
    %c0_i32_1 = arith.constant 0 : i32
    return %c0_i32, %c0_i32_0 : i32, i32
  }
  func.func @transform_2(%arg0: i32) -> (i32, i32) {
    %c0_i32 = arith.constant 0 : i32
    %c0_i32_0 = arith.constant 0 : i32
    %c0_i32_1 = arith.constant 0 : i32
    return %c0_i32, %c0_i32_0 : i32, i32
  }
  func.func @transform_3(%arg0: i32) -> (i32, i32) {
    %c0_i32 = arith.constant 0 : i32
    %c0_i32_0 = arith.constant 0 : i32
    return %c0_i32, %arg0 : i32, i32
  }
}

</mosaic_0001>

<llo_original>
// kernel: tpu_custom_call.1
$region0: #{tpu_custom_call.1}
  #allocation0 [shape = 'u32[]', space=smem, size = 0x4, offset = 0x4, fixed_abs, tag = 'smem constant byte address 0x4 - core index']
  #allocation1 [shape = 'u32[144,128]{1,0:T(1,128)}', space=vmem, size = 0x12000, scoped, tag = 'internal scratch']
  %s0 = inlined_call_operand.vmem [shape: f32[6,128], index: 0, kind: input, shape index: {}]
  %s1 = inlined_call_operand.vmem [shape: f32[24,6], index: 1, kind: input, shape index: {}]
  %s2 = inlined_call_operand.vmem [shape: f32[4,8], index: 2, kind: input, shape index: {}]
  %s3 = inlined_call_operand.hbm [shape: f32[4,128], index: 3, kind: output, shape index: {}]
  %s4 = sld [smem:[#allocation0]]
  $region22: #{tpu_custom_call.1} parent=0
    _
  %s6 = ssub.s32 1, %s4
  %s7 = scalar_select 0, %s6, %s4
  $region1: #{tpu_custom_call.1} parent=0
    #allocation2 [shape = 'u8[2048]{0}', space=vmem, size = 0x800, scoped, tag = 'output window, operand 0, single buffered']
    #allocation3 [shape = 's32[1]{0}', space=sflag, size = 0x4, scoped, tag = 'scoped memory for tpu_custom_call.1']
    %8 = vsyncpa [#allocation3], 0
    // Predicated region
    $region2: #{tpu_custom_call.1} parent=1 // pred_check
      _
    $region3: #{tpu_custom_call.1} parent=1 // pred_check_branch
      %10 = sbr.rel (0) target = $region5
    $region4: #{tpu_custom_call.1} parent=1 // pred_region
      _
    $region5: #{tpu_custom_call.1} parent=1 // pred_fallthru
      _
    // Predicated region
    $region6: #{tpu_custom_call.1} parent=1 // pred_check
      _
    $region7: #{tpu_custom_call.1} parent=1 // pred_check_branch
      %12 = sbr.rel (0) target = $region9
    $region8: #{tpu_custom_call.1} parent=1 // pred_region
      _
    $region9: #{tpu_custom_call.1} parent=1 // pred_fallthru
      _
    // Predicated region
    $region10: #{tpu_custom_call.1} parent=1 // pred_check
      _
    $region11: #{tpu_custom_call.1} parent=1 // pred_check_branch
      %14 = sbr.rel (0) target = $region13
    $region12: #{tpu_custom_call.1} parent=1 // pred_region
      _
    $region13: #{tpu_custom_call.1} parent=1 // pred_fallthru
      _
    %v15 = vld [vmem:[%s0] sm:$0x3f]
    %v16 = vld [vmem:[%s1] sm:$0xff]
    %v17 = vld [vmem:[%s1 + $0x8] sm:$0xff]
    %v18 = vld [vmem:[%s1 + $0x10] sm:$0xff]
    %vm19 = vcmask 48128
    %v21 = vsel %vm19, %v16, 0
    %v24 = vsel %vm19, %v17, 0
    %v27 = vsel %vm19, %v18, 0
    %vm29 = vcmask 1045504
    %v31 = vsel %vm29, %v15, 0
    %33 = vmatprep.subr.mxu0 0.0
    %34 = vmatpush1.msra.mxu0 0.0
    %35 = vmatprep.subr.mxu0 0.0
    %36 = vmatpush1.msra.mxu0 0.0
    %37 = vmatprep.subr.mxu0 0.0
    %38 = vmatpush1.msra.mxu0 0.0
    %39 = vmatprep.subr.mxu0 0.0
    %40 = vmatpush1.msra.mxu0 0.0
    %41 = vmatprep.subr.mxu0 0.0
    %42 = vmatpush1.msra.mxu0 0.0
    %43 = vmatprep.subr.mxu0 0.0
    %44 = vmatpush1.msra.mxu0 0.0
    %45 = vmatprep.subr.mxu0 0.0
    %46 = vmatpush1.msra.mxu0 0.0
    %47 = vmatprep.subr.mxu0 0.0
    %48 = vmatpush1.msra.mxu0 0.0
    %49 = vmatprep.subr.mxu0 0.0
    %50 = vmatpush1.msra.mxu0 0.0
    %51 = vmatprep.subr.mxu0 0.0
    %52 = vmatpush1.msra.mxu0 0.0
    %53 = vmatprep.subr.mxu0 0.0
    %54 = vmatpush1.msra.mxu0 0.0
    %55 = vmatprep.subr.mxu0 0.0
    %56 = vmatpush1.msra.mxu0 0.0
    %57 = vmatprep.subr.mxu0 0.0
    %58 = vmatpush1.msra.mxu0 0.0
    %59 = vmatprep.subr.mxu0 0.0
    %60 = vmatpush1.msra.mxu0 0.0
    %61 = vmatprep.subr.mxu0 0.0
    %62 = vmatpush1.msra.mxu0 0.0
    %63 = vmatprep.subr.mxu0 0.0
    %64 = vmatpush1.msra.mxu0 %v31
    %65 = vmatprep.subr.mxu0 0.0
    %66 = vmatpush2.msra.mxu0 0.0
    %67 = vmatprep.subr.mxu0 0.0
    %68 = vmatpush2.msra.mxu0 0.0
    %69 = vmatprep.subr.mxu0 0.0
    %70 = vmatpush2.msra.mxu0 0.0
    %71 = vmatprep.subr.mxu0 0.0
    %72 = vmatpush2.msra.mxu0 0.0
    %73 = vmatprep.subr.mxu0 0.0
    %74 = vmatpush2.msra.mxu0 0.0
    %75 = vmatprep.subr.mxu0 0.0
    %76 = vmatpush2.msra.mxu0 0.0
    %77 = vmatprep.subr.mxu0 0.0
    %78 = vmatpush2.msra.mxu0 0.0
    %79 = vmatprep.subr.mxu0 0.0
    %80 = vmatpush2.msra.mxu0 0.0
    %81 = vmatprep.subr.mxu0 0.0
    %82 = vmatpush2.msra.mxu0 0.0
    %83 = vmatprep.subr.mxu0 0.0
    %84 = vmatpush2.msra.mxu0 0.0
    %85 = vmatprep.subr.mxu0 0.0
    %86 = vmatpush2.msra.mxu0 0.0
    %87 = vmatprep.subr.mxu0 0.0
    %88 = vmatpush2.msra.mxu0 0.0
    %89 = vmatprep.subr.mxu0 0.0
    %90 = vmatpush2.msra.mxu0 0.0
    %91 = vmatprep.subr.mxu0 0.0
    %92 = vmatpush2.msra.mxu0 0.0
    %93 = vmatprep.subr.mxu0 0.0
    %94 = vmatpush2.msra.mxu0 0.0
    %95 = vmatprep.subr.mxu0 0.0
    %96 = vmatpush2.msra.mxu0 0.0
    %97 = vmatprep.mubr.f32.mxu0 0.0
    %98 = vmatmul.mubr.f32.gmra.mxu0 %v21
    %v99 = vpop.f32.mrf.mxu0
    %v100 = vadd.f32 0.0, %v99
    %v101 = vpop.f32.mrf.mxu0
    %102 = vmatprep.mubr.f32.mxu0 0.0
    %103 = vmatmul.mubr.f32.gmra.mxu0 %v24
    %v104 = vpop.f32.mrf.mxu0
    %v105 = vadd.f32 0.0, %v104
    %v106 = vpop.f32.mrf.mxu0
    %107 = vmatprep.mubr.f32.mxu0 0.0
    %108 = vmatmul.mubr.f32.gmra.mxu0 %v27
    %v109 = vpop.f32.mrf.mxu0
    %v110 = vadd.f32 0.0, %v109
    %v111 = vpop.f32.mrf.mxu0
    %112 = vdwg.mxu0
    %v113 = vsub.f32 0.0, %v100
    %v114 = vsub.f32 0.0, %v105
    %v115 = vsub.f32 0.0, %v110
    %v116 = vmul.f32 %v113, 1.442695
    %v117 = vpow.pop %v116
    %v118 = vmul.f32 %v114, 1.442695
    %v119 = vpow.pop %v118
    %v120 = vmul.f32 %v115, 1.442695
    %v121 = vpow.pop %v120
    %v122 = vadd.f32 %v117, 1.0
    %v123 = vadd.f32 %v119, 1.0
    %v124 = vadd.f32 %v121, 1.0
    %v125 = vrcp.pop %v122
    %v126 = vrcp.pop %v123
    %v127 = vrcp.pop %v124
    %v128 = vmul.f32 %v125, %v126
    %v129 = vmul.f32 %v128, %v127
    %v130 = vld [vmem:[%s2] sm:$0xf]
    %vm131 = vcmask 64512
    %v133 = vsel %vm131, %v130, 0
    %135 = vmatprep.subr.mxu0 0.0
    %136 = vmatpush1.msra.mxu0 0.0
    %137 = vmatprep.subr.mxu0 0.0
    %138 = vmatpush1.msra.mxu0 0.0
    %139 = vmatprep.subr.mxu0 0.0
    %140 = vmatpush1.msra.mxu0 0.0
    %141 = vmatprep.subr.mxu0 0.0
    %142 = vmatpush1.msra.mxu0 0.0
    %143 = vmatprep.subr.mxu0 0.0
    %144 = vmatpush1.msra.mxu0 0.0
    %145 = vmatprep.subr.mxu0 0.0
    %146 = vmatpush1.msra.mxu0 0.0
    %147 = vmatprep.subr.mxu0 0.0
    %148 = vmatpush1.msra.mxu0 0.0
    %149 = vmatprep.subr.mxu0 0.0
    %150 = vmatpush1.msra.mxu0 0.0
    %151 = vmatprep.subr.mxu0 0.0
    %152 = vmatpush1.msra.mxu0 0.0
    %153 = vmatprep.subr.mxu0 0.0
    %154 = vmatpush1.msra.mxu0 0.0
    %155 = vmatprep.subr.mxu0 0.0
    %156 = vmatpush1.msra.mxu0 0.0
    %157 = vmatprep.subr.mxu0 0.0
    %158 = vmatpush1.msra.mxu0 0.0
    %159 = vmatprep.subr.mxu0 0.0
    %160 = vmatpush1.msra.mxu0 0.0
    %161 = vmatprep.subr.mxu0 0.0
    %162 = vmatpush1.msra.mxu0 0.0
    %163 = vmatprep.subr.mxu0 0.0
    %164 = vmatpush1.msra.mxu0 0.0
    %165 = vmatprep.subr.mxu0 0.0
    %166 = vmatpush1.msra.mxu0 %v129
    %167 = vmatprep.subr.mxu0 0.0
    %168 = vmatpush2.msra.mxu0 0.0
    %169 = vmatprep.subr.mxu0 0.0
    %170 = vmatpush2.msra.mxu0 0.0
    %171 = vmatprep.subr.mxu0 0.0
    %172 = vmatpush2.msra.mxu0 0.0
    %173 = vmatprep.subr.mxu0 0.0
    %174 = vmatpush2.msra.mxu0 0.0
    %175 = vmatprep.subr.mxu0 0.0
    %176 = vmatpush2.msra.mxu0 0.0
    %177 = vmatprep.subr.mxu0 0.0
    %178 = vmatpush2.msra.mxu0 0.0
    %179 = vmatprep.subr.mxu0 0.0
    %180 = vmatpush2.msra.mxu0 0.0
    %181 = vmatprep.subr.mxu0 0.0
    %182 = vmatpush2.msra.mxu0 0.0
    %183 = vmatprep.subr.mxu0 0.0
    %184 = vmatpush2.msra.mxu0 0.0
    %185 = vmatprep.subr.mxu0 0.0
    %186 = vmatpush2.msra.mxu0 0.0
    %187 = vmatprep.subr.mxu0 0.0
    %188 = vmatpush2.msra.mxu0 0.0
    %189 = vmatprep.subr.mxu0 0.0
    %190 = vmatpush2.msra.mxu0 0.0
    %191 = vmatprep.subr.mxu0 0.0
    %192 = vmatpush2.msra.mxu0 0.0
    %193 = vmatprep.subr.mxu0 0.0
    %194 = vmatpush2.msra.mxu0 0.0
    %195 = vmatprep.subr.mxu0 0.0
    %196 = vmatpush2.msra.mxu0 0.0
    %197 = vmatprep.subr.mxu0 0.0
    %198 = vmatpush2.msra.mxu0 0.0
    %199 = vmatprep.mubr.f32.mxu0 0.0
    %200 = vmatmul.mubr.f32.gmra.mxu0 %v133
    %v201 = vpop.f32.mrf.mxu0
    %v202 = vadd.f32 0.0, %v201
    %v203 = vpop.f32.mrf.mxu0
    %204 = vdwg.mxu0
    %205 = vst [vmem:[#allocation2] sm:$0xf] %v202
    // Predicated region
    $region14: #{tpu_custom_call.1} parent=1 // pred_check
      _
    $region15: #{tpu_custom_call.1} parent=1 // pred_check_branch
      %207 = sbr.rel (0) target = $region17
    $region16: #{tpu_custom_call.1} parent=1 // pred_region
      %s209 = ssub.s32 64, 64
      %210 = vsyncadd [#allocation3], %s209
      %s212 = sshll.u32 [#allocation2], 4
      %s213 = int_to_ptr.vmem [resolvable:$true] %s212
      %215 = dma.vmem_to_hbm [thread:$0]  %s213, 64, %s3, [#allocation3]
    $region17: #{tpu_custom_call.1} parent=1 // pred_fallthru
      _
    // Predicated region
    $region18: #{tpu_custom_call.1} parent=1 // pred_check
      _
    $region19: #{tpu_custom_call.1} parent=1 // pred_check_branch
      %217 = sbr.rel (0) target = $region21
    $region20: #{tpu_custom_call.1} parent=1 // pred_region
      %218 = dma.done [#allocation3], 64
    $region21: #{tpu_custom_call.1} parent=1 // pred_fallthru
      _
    %219 = vsyncpa [#allocation3], 1

</llo_original>
